<compile_context>
chip_gen: v5e
topology: v5e:2x2
jax: 0.10.0
libtpu: 0.0.40
codegen_flags: <defaults>
</compile_context>

<pallas_src>
import math

import jax
import jax.numpy as jnp
from jax.experimental import pallas as pl
from jax.experimental.pallas import tpu as pltpu

_SHIFT = math.log(2.0)
_LANE = 128
_SUBLANE = 8


def _shifted_softplus_kernel(x_ref, o_ref):
    x = x_ref[...]
    # Numerically stable softplus: log(1+exp(x)) = max(x,0) + log1p(exp(-|x|)),
    # computed in the input's native floating dtype.
    sp = jnp.maximum(x, 0) + jnp.log1p(jnp.exp(-jnp.abs(x)))
    o_ref[...] = (sp - _SHIFT).astype(o_ref.dtype)


def _round_down(v, m):
    return (v // m) * m


def _round_up(v, m):
    return -(-v // m) * m


def shifted_softplus(x, *, block_bytes=2 * 1024 * 1024, donate=False):
    """softplus(x) - log(2), elementwise, via a tiled Pallas TPU kernel.

    Floating inputs keep their dtype; integer/bool inputs are promoted to
    float32 (PyTorch's F.softplus does not accept them at all).
    """
    orig_shape = x.shape
    if not jnp.issubdtype(x.dtype, jnp.floating):
        x = x.astype(jnp.float32)
    dtype = x.dtype
    itemsize = jnp.dtype(dtype).itemsize
    n = x.size
    if n == 0:
        return x.reshape(orig_shape)

    flat = x.reshape(-1)

    # ---- choose a 2-D (rows, cols) layout: lane-dense whenever it is free ----
    cols = None
    for c in (512, 1024, 2048, 4096, 8192, 256, 128):
        if n % c == 0:
            cols = c
            break
    if cols is not None:
        x2 = flat.reshape(n // cols, cols)
    elif x.ndim >= 2 and n * itemsize > block_bytes:
        # Large array whose total size is not a multiple of 128: fall back to
        # the original trailing dim as the lane axis (still no pad / slice).
        x2 = x.reshape(-1, orig_shape[-1])
    else:
        # Small or 1-D oddball: a single flat slab.
        x2 = flat.reshape(1, n)

    rows, cols = x2.shape

    # ---- byte-budgeted block selection ((8,128) VMEM-tile padding aware) -----
    if rows == 1:
        # Tile along lanes.  A 1-row block still occupies 8 sublanes of every
        # (8,128) VMEM tile, so include that padding in the budget.
        bc_budget = max(
            _LANE, _round_down(block_bytes // (_SUBLANE * itemsize), _LANE)
        )
        bc = cols if cols <= bc_budget else bc_budget
        block = (1, bc)
        grid = (pl.cdiv(cols, bc),)
        index_map = lambda i: (0, i)
    else:
        cols_padded = _round_up(cols, _LANE)
        if rows * cols_padded * itemsize <= block_bytes:
            br = rows  # whole array in one full-extent block
        else:
            br = max(
                _SUBLANE,
                _round_down(block_bytes // (cols_padded * itemsize), _SUBLANE),
            )
        block = (br, cols)
        grid = (pl.cdiv(rows, br),)
        index_map = lambda i: (i, 0)

    out = pl.pallas_call(
        _shifted_softplus_kernel,
        out_shape=jax.ShapeDtypeStruct((rows, cols), dtype),
        grid_spec=pltpu.PrefetchScalarGridSpec(
            num_scalar_prefetch=0,
            grid=grid,
            in_specs=[pl.BlockSpec(block, index_map)],
            out_specs=pl.BlockSpec(block, index_map),
        ),
        compiler_params=pltpu.CompilerParams(
            # Single, embarrassingly parallel grid axis: lets Mosaic shard the
            # loop across both v7x TensorCores; neutral on v5e/v6e.
            dimension_semantics=("parallel",),
            # ~2 MiB blocks, double-buffered in + out ≈ 8 MiB: leave explicit
            # headroom on every generation (incl. v7x's 64 MiB total VMEM).
            vmem_limit_bytes=32 * 1024 * 1024,
        ),
        input_output_aliases=({0: 0} if donate else {}),
    )(x2)

    return out.reshape(orig_shape)


if __name__ == "__main__":
    key = jax.random.PRNGKey(0)
    k1, k2, k3 = jax.random.split(key, 3)

    # Node features [num_nodes, hidden_channels] as fed to ShiftedSoftplus
    # inside EncoderLayer2's attention / weight nets.
    x_node = jax.random.normal(k1, (8, 32), dtype=jnp.float32) * 3.0
    # Lane-dense multi-row case (total elements a multiple of 128).
    x_big = jax.random.normal(k2, (300, 96), dtype=jnp.float32) * 4.0
    # Awkward shape (total not a multiple of 128) -> flat-slab path.
    x_odd = jax.random.normal(k3, (7, 13), dtype=jnp.float32)

    for x in (x_node, x_big, x_odd):
        y = jax.block_until_ready(shifted_softplus(x))
        ref = jax.nn.softplus(x) - math.log(2.0)
        assert y.shape == x.shape and y.dtype == x.dtype
        err = float(jnp.max(jnp.abs(y - ref)))
        assert err < 1e-5, err

    print("KERNEL_OK")
</pallas_src>

<mosaic_0001>
module attributes {stable_mosaic.version = 11 : i64} {
  func.func @_shifted_softplus_kernel(%arg0: i32, %arg1: memref<1x256xf32, #tpu.memory_space<vmem>>, %arg2: memref<1x256xf32, #tpu.memory_space<vmem>>) attributes {dimension_semantics = [#tpu.dimension_semantics<parallel>], iteration_bounds = array<i64: 1>, scalar_prefetch = 0 : i64, scratch_operands = 0 : i64, tpu.core_type = #tpu.core_type<tc>, window_params = [{transform_indices = @transform_0, window_bounds = array<i64: 1, 256>}, {transform_indices = @transform_1, window_bounds = array<i64: 1, 256>}]} {
    %c0 = arith.constant 0 : index
    %c0_0 = arith.constant 0 : index
    %0 = vector.load %arg1[%c0, %c0_0] : memref<1x256xf32, #tpu.memory_space<vmem>>, vector<1x256xf32>
    %cst = arith.constant 0.000000e+00 : f32
    %1 = vector.broadcast %cst : f32 to vector<1x256xf32>
    %2 = arith.maximumf %0, %1 : vector<1x256xf32>
    %3 = math.absf %0 : vector<1x256xf32>
    %cst_1 = arith.constant 0.000000e+00 : f32
    %4 = vector.broadcast %cst_1 : f32 to vector<1x256xf32>
    %5 = arith.subf %4, %3 : vector<1x256xf32>
    %6 = math.exp %5 : vector<1x256xf32>
    %7 = math.log1p %6 : vector<1x256xf32>
    %8 = arith.addf %2, %7 : vector<1x256xf32>
    %cst_2 = arith.constant 0.693147182 : f32
    %9 = vector.broadcast %cst_2 : f32 to vector<1x256xf32>
    %10 = arith.subf %8, %9 : vector<1x256xf32>
    %c0_3 = arith.constant 0 : index
    %c0_4 = arith.constant 0 : index
    %11 = vector.load %arg2[%c0_3, %c0_4] : memref<1x256xf32, #tpu.memory_space<vmem>>, vector<1x256xf32>
    tpu.vector_store %arg2[%c0_3, %c0_4], %10 {strides = array<i32>} : memref<1x256xf32, #tpu.memory_space<vmem>>, vector<1x256xf32>,
    return
  }
  func.func @transform_0(%arg0: i32) -> (i32, i32) {
    %c0_i32 = arith.constant 0 : i32
    %c0_i32_0 = arith.constant 0 : i32
    return %c0_i32, %arg0 : i32, i32
  }
  func.func @transform_1(%arg0: i32) -> (i32, i32) {
    %c0_i32 = arith.constant 0 : i32
    %c0_i32_0 = arith.constant 0 : i32
    return %c0_i32, %arg0 : i32, i32
  }
}

</mosaic_0001>

<llo_original>
// kernel: tpu_custom_call.1
$region0: #{tpu_custom_call.1}
  #allocation0 [shape = 'u32[]', space=smem, size = 0x4, offset = 0x4, fixed_abs, tag = 'smem constant byte address 0x4 - core index']
  #allocation1 [shape = 'u32[72,128]{1,0:T(1,128)}', space=vmem, size = 0x9000, scoped, tag = 'internal scratch']
  %s0 = inlined_call_operand.hbm [shape: f32[1,256], index: 0, kind: input, shape index: {}]
  %s1 = inlined_call_operand.hbm [shape: f32[1,256], index: 1, kind: output, shape index: {}]
  %s2 = sld [smem:[#allocation0]]
  $region18: #{tpu_custom_call.1} parent=0
    _
  %s4 = ssub.s32 1, %s2
  %s5 = scalar_select 0, %s4, %s2
  $region1: #{tpu_custom_call.1} parent=0
    #allocation2 [shape = 'u8[1024]{0}', space=vmem, size = 0x400, scoped, tag = 'input window, operand 0, single buffered']
    #allocation3 [shape = 's32[1]{0}', space=sflag, size = 0x4, scoped, tag = 'scoped memory for tpu_custom_call.1']
    #allocation4 [shape = 's32[1]{0}', space=sflag, size = 0x4, scoped, tag = 'scoped memory for tpu_custom_call.1']
    #allocation5 [shape = 'u8[1024]{0}', space=vmem, size = 0x400, scoped, tag = 'output window, operand 0, single buffered']
    %6 = vsyncpa [#allocation3], 0
    %7 = vsyncpa [#allocation4], 0
    // Predicated region
    $region2: #{tpu_custom_call.1} parent=1 // pred_check
      _
    $region3: #{tpu_custom_call.1} parent=1 // pred_check_branch
      %9 = sbr.rel (0) target = $region5
    $region4: #{tpu_custom_call.1} parent=1 // pred_region
      %11 = vsyncadd [#allocation3], 0
      %s13 = sshll.u32 %s0, 4
      %s14 = int_to_ptr.hbm [resolvable:$true] %s13
      %s15 = sshll.u32 [#allocation2], 4
      %s16 = int_to_ptr.vmem [resolvable:$true] %s15
      %18 = dma.hbm_to_vmem [thread:$0]  %s14, 32, %s16, [#allocation3]
    $region5: #{tpu_custom_call.1} parent=1 // pred_fallthru
      _
    // Predicated region
    $region6: #{tpu_custom_call.1} parent=1 // pred_check
      _
    $region7: #{tpu_custom_call.1} parent=1 // pred_check_branch
      %20 = sbr.rel (0) target = $region9
    $region8: #{tpu_custom_call.1} parent=1 // pred_region
      %22 = dma.done [#allocation3], 32
    $region9: #{tpu_custom_call.1} parent=1 // pred_fallthru
      _
    %v23 = vld [vmem:[#allocation2] sm:$0x3]
    %v24 = vmax.f32 %v23, 0.0
    %v25 = vand.u32 2147483647, %v23
    %v26 = vsub.f32 0.0, %v25
    %v27 = vmul.f32 %v26, 1.442695
    %v28 = vpow.pop %v27
    %v29 = vadd.f32 %v28, 1.0
    %v30 = vlog2.pop %v29
    %v31 = vmul.f32 %v30, 0.6931472
    %v32 = vmul.f32 -0.5, %v28
    %v33 = vadd.f32 %v32, 1.0
    %v34 = vmul.f32 %v33, %v28
    %v35 = vand.u32 2147483647, %v28
    %vm36 = vcmp.lt.f32.partialorder %v35, 0.0004427343
    %v37 = vsel %vm36, %v34, %v31
    %v38 = vadd.f32 %v24, %v37
    %v39 = vsub.f32 %v38, 0.6931472
    %v40 = vlaneseq
    %vm41 = vcmp.ge.s32.totalorder %v40, 0
    %vm42 = vcmp.lt.s32.totalorder %v40, 256
    %vm43 = vmand %vm41, %vm42
    %44 = vst.msk [vmem:[#allocation5] sm:$0x3] %vm43, %v39
    // Predicated region
    $region10: #{tpu_custom_call.1} parent=1 // pred_check
      _
    $region11: #{tpu_custom_call.1} parent=1 // pred_check_branch
      %46 = sbr.rel (0) target = $region13
    $region12: #{tpu_custom_call.1} parent=1 // pred_region
      %48 = vsyncadd [#allocation4], 0
      %s50 = sshll.u32 [#allocation5], 4
      %s51 = int_to_ptr.vmem [resolvable:$true] %s50
      %s52 = sshll.u32 %s1, 4
      %s53 = int_to_ptr.hbm [resolvable:$true] %s52
      %55 = dma.vmem_to_hbm [thread:$0]  %s51, 32, %s53, [#allocation4]
    $region13: #{tpu_custom_call.1} parent=1 // pred_fallthru
      _
    // Predicated region
    $region14: #{tpu_custom_call.1} parent=1 // pred_check
      _
    $region15: #{tpu_custom_call.1} parent=1 // pred_check_branch
      %57 = sbr.rel (0) target = $region17
    $region16: #{tpu_custom_call.1} parent=1 // pred_region
      %59 = dma.done [#allocation4], 32
    $region17: #{tpu_custom_call.1} parent=1 // pred_fallthru
      _
    %60 = vsyncpa [#allocation3], 1
    %61 = vsyncpa [#allocation4], 1

</llo_original>
